<compile_context>
chip_gen: v5e
topology: v5e:2x2
jax: 0.10.0
libtpu: 0.0.40
codegen_flags: <defaults>
</compile_context>

<pallas_src>
import functools

import jax
import jax.numpy as jnp
import numpy as np
from jax.experimental import pallas as pl
from jax.experimental.pallas import tpu as pltpu

BN_EPS = 1e-5
LEAKY_SLOPE = 0.01  # PyTorch nn.LeakyReLU default


def _leaky(x):
    return jnp.where(x > 0, x, LEAKY_SLOPE * x)


def _round_up(a, m):
    return ((a + m - 1) // m) * m


# -----------------------------------------------------------------------------
# Kernel
# -----------------------------------------------------------------------------
def vae_fused_kernel(
    # inputs
    x_ref,
    w1, b1,          # encoder Linear 1 (BN1 pre-folded)
    w2, b2,          # encoder Linear 2 (BN2 pre-folded)
    wh, bh,          # fused head: Linear3 folded into [mu || logvar]
    wd1, bd1,        # decoder Linear 1
    wd2, bd2,        # decoder Linear 2
    wd3, bd3,        # decoder Linear 3
    # output: lane-packed [rec_x | mu | logvar | zero-pad to 128 lanes]
    out_ref,
    *,
    latent_dim,
    num_dofs,
):
    mm_dtype = w1.dtype  # f32 or bf16 (set by the wrapper)

    def dense(a, w_ref, b_ref):
        # MXU matmul with f32 accumulation; bias add rides in the VALU epilogue.
        return (
            jnp.dot(a.astype(mm_dtype), w_ref[...], preferred_element_type=jnp.float32)
            + b_ref[...]
        )

    x = x_ref[...]

    # ---- encoder (BN folded into w1/w2; Dropout = identity in eval mode) ----
    h = _leaky(dense(x, w1, b1))
    h = _leaky(dense(h, w2, b2))

    # ---- fused head: Linear3 + [mu || logvar] in a single matmul ----
    head = dense(h, wh, bh)              # (tm, 2*latent), f32
    mu = head[:, :latent_dim]

    # ---- decoder (z = mu, deterministic forward) ----
    d = _leaky(dense(mu, wd1, bd1))
    d = _leaky(dense(d, wd2, bd2))
    rec = dense(d, wd3, bd3)             # (tm, num_dofs), f32

    # Direct slice-stores into the lane-padded output slab (no concat temp).
    out_used = num_dofs + 2 * latent_dim
    out_ref[:, :num_dofs] = rec
    out_ref[:, num_dofs:out_used] = head
    pad = out_ref.shape[-1] - out_used   # static
    if pad > 0:
        out_ref[:, out_used:] = jnp.zeros((rec.shape[0], pad), jnp.float32)


# -----------------------------------------------------------------------------
# Parameter construction & preprocessing
# -----------------------------------------------------------------------------
def init_params(key, num_dofs, latent_dim, hidden_dim):
    """Deterministic synthetic parameters (PyTorch-like uniform init).

    Linear weights are stored pre-transposed as (in_features, out_features).
    """
    def linear(k, fan_in, fan_out):
        kw, kb = jax.random.split(k)
        bound = 1.0 / np.sqrt(fan_in)
        w = jax.random.uniform(kw, (fan_in, fan_out), jnp.float32, -bound, bound)
        b = jax.random.uniform(kb, (1, fan_out), jnp.float32, -bound, bound)
        return w, b

    keys = jax.random.split(key, 8)
    p = {}
    # BatchNorm1d defaults: gamma=1, beta=0, running_mean=0, running_var=1
    p["bn1_g"] = jnp.ones((1, num_dofs), jnp.float32)
    p["bn1_b"] = jnp.zeros((1, num_dofs), jnp.float32)
    p["bn1_m"] = jnp.zeros((1, num_dofs), jnp.float32)
    p["bn1_v"] = jnp.ones((1, num_dofs), jnp.float32)
    p["w1"], p["b1"] = linear(keys[0], num_dofs, hidden_dim)
    p["bn2_g"] = jnp.ones((1, hidden_dim), jnp.float32)
    p["bn2_b"] = jnp.zeros((1, hidden_dim), jnp.float32)
    p["bn2_m"] = jnp.zeros((1, hidden_dim), jnp.float32)
    p["bn2_v"] = jnp.ones((1, hidden_dim), jnp.float32)
    p["w2"], p["b2"] = linear(keys[1], hidden_dim, hidden_dim)
    p["w3"], p["b3"] = linear(keys[2], hidden_dim, hidden_dim)
    p["wmu"], p["bmu"] = linear(keys[3], hidden_dim, latent_dim)
    p["wlv"], p["blv"] = linear(keys[4], hidden_dim, latent_dim)
    p["wd1"], p["bd1"] = linear(keys[5], latent_dim, hidden_dim)
    p["wd2"], p["bd2"] = linear(keys[6], hidden_dim, hidden_dim)
    p["wd3"], p["bd3"] = linear(keys[7], hidden_dim, num_dofs)
    return p


def prepare_kernel_params(p, matmul_dtype=jnp.bfloat16):
    """Offline folding, done once outside the hot path (all in f32):

      * eval-mode BatchNorms folded into the following Linear (w1, w2),
      * fc_mu / fc_logvar fused into one head,
      * encoder Linear3 folded into the head (no nonlinearity in between):
            wh' = w3 @ [wmu|wlv],  bh' = b3 @ [wmu|wlv] + [bmu|blv].

    Weights may then be cast to bf16 for native-rate MXU on v5e/v6e (the
    kernel keeps f32 accumulation); biases stay f32.
    """
    # BN(x) = x * s + t, with s = gamma * rsqrt(var + eps), t = beta - mean * s.
    s1 = p["bn1_g"] * jax.lax.rsqrt(p["bn1_v"] + BN_EPS)      # (1, num_dofs)
    t1 = p["bn1_b"] - p["bn1_m"] * s1
    w1 = p["w1"] * s1.T                                        # scale rows of (in, out)
    b1 = t1 @ p["w1"] + p["b1"]

    s2 = p["bn2_g"] * jax.lax.rsqrt(p["bn2_v"] + BN_EPS)      # (1, hidden)
    t2 = p["bn2_b"] - p["bn2_m"] * s2
    w2 = p["w2"] * s2.T
    b2 = t2 @ p["w2"] + p["b2"]

    wh_raw = jnp.concatenate([p["wmu"], p["wlv"]], axis=1)     # (hidden, 2*latent)
    bh_raw = jnp.concatenate([p["bmu"], p["blv"]], axis=1)     # (1, 2*latent)
    wh = p["w3"] @ wh_raw                                      # fold Linear3 into head
    bh = p["b3"] @ wh_raw + bh_raw

    md = matmul_dtype
    return {
        "w1": w1.astype(md), "b1": b1,
        "w2": w2.astype(md), "b2": b2,
        "wh": wh.astype(md), "bh": bh,
        "wd1": p["wd1"].astype(md), "bd1": p["bd1"],
        "wd2": p["wd2"].astype(md), "bd2": p["bd2"],
        "wd3": p["wd3"].astype(md), "bd3": p["bd3"],
    }


KPARAM_ORDER = [
    "w1", "b1", "w2", "b2",
    "wh", "bh",
    "wd1", "bd1", "wd2", "bd2", "wd3", "bd3",
]


# -----------------------------------------------------------------------------
# Wrapper
# -----------------------------------------------------------------------------
@functools.partial(jax.jit, static_argnames=("tile_m",))
def biomech_prior_vae_forward(x, kparams, tile_m=1024):
    """Returns (rec_x, mu, logvar) like BiomechPriorVAE.forward (eval mode)."""
    batch, num_dofs = x.shape
    latent_dim = kparams["wh"].shape[1] // 2
    hidden_dim = kparams["w1"].shape[1]
    out_used = num_dofs + 2 * latent_dim
    out_w = _round_up(out_used, 128)          # lane-dense (unmasked) output stores
    mm_dtype = kparams["w1"].dtype
    itemsize = jnp.dtype(mm_dtype).itemsize
    pack = 16 if mm_dtype == jnp.bfloat16 else 8   # sublane packing of streamed x tile

    # ---- batch tile selection ----
    padded_min = _round_up(batch, pack)
    if padded_min <= 2 * pack:
        tm = padded_min                                   # too small to split
    elif padded_min <= 2 * tile_m:
        # give the grid >= 2 steps so v7x can shard batch tiles across both TCs
        tm = _round_up(-(-padded_min // 2), pack)
    else:
        tm = tile_m                                       # amortize per-step overhead

    # Cap tile by a VMEM working-set estimate (v7x has only 64 MiB physical,
    # 32 MiB scoped default; budget ~24 MiB).  Weights count x2: BlockSpec may
    # double-buffer even with a constant index_map.
    weight_bytes = sum(
        int(np.prod(kparams[n].shape)) * jnp.dtype(kparams[n].dtype).itemsize
        for n in KPARAM_ORDER
    )

    def vmem_estimate(t):
        act = 6 * t * hidden_dim * 4          # live f32 activation temps (conservative)
        xin = 2 * t * num_dofs * itemsize     # double-buffered input tile
        out = 2 * t * out_w * 4               # double-buffered output tile
        return 2 * weight_bytes + act + xin + out

    VMEM_BUDGET = 24 << 20
    while tm > pack and vmem_estimate(tm) > VMEM_BUDGET:
        tm = max(pack, _round_up(tm // 2, pack))

    grid_m = -(-batch // tm)
    padded = grid_m * tm
    xp = x.astype(mm_dtype)
    if padded != batch:
        xp = jnp.pad(xp, ((0, padded - batch), (0, 0)))

    # v5e scoped-VMEM default is 16 MiB; raise it when the working set is bigger.
    vmem_limit = None
    est = vmem_estimate(tm)
    if est > (16 << 20):
        vmem_limit = int(min(2 * est, 64 << 20))

    def weight_spec(arr):
        # Full-array block with a constant index map -> stays VMEM-resident
        # across all batch-grid steps (DMA'd once).
        return pl.BlockSpec(arr.shape, lambda i, nd=arr.ndim: (0,) * nd)

    in_specs = [pl.BlockSpec((tm, num_dofs), lambda i: (i, 0))] + [
        weight_spec(kparams[name]) for name in KPARAM_ORDER
    ]
    out_spec = pl.BlockSpec((tm, out_w), lambda i: (i, 0))

    # Advisory cost estimate so XLA schedules surrounding pad/slice HLO well.
    layer_dims = [
        (num_dofs, hidden_dim), (hidden_dim, hidden_dim), (hidden_dim, 2 * latent_dim),
        (latent_dim, hidden_dim), (hidden_dim, hidden_dim), (hidden_dim, num_dofs),
    ]
    cost = pl.CostEstimate(
        flops=2 * padded * sum(k * n for k, n in layer_dims),
        transcendentals=0,
        bytes_accessed=padded * num_dofs * itemsize + weight_bytes + padded * out_w * 4,
    )

    kernel = functools.partial(
        vae_fused_kernel, latent_dim=latent_dim, num_dofs=num_dofs
    )
    packed = pl.pallas_call(
        kernel,
        out_shape=jax.ShapeDtypeStruct((padded, out_w), jnp.float32),
        grid=(grid_m,),
        in_specs=in_specs,
        out_specs=out_spec,
        compiler_params=pltpu.CompilerParams(
            dimension_semantics=("parallel",),   # shard batch tiles across TCs (v7x)
            vmem_limit_bytes=vmem_limit,
        ),
        cost_estimate=cost,
    )(xp, *[kparams[name] for name in KPARAM_ORDER])

    packed = packed[:batch]
    rec_x = packed[:, :num_dofs]
    mu = packed[:, num_dofs:num_dofs + latent_dim]
    logvar = packed[:, num_dofs + latent_dim:out_used]
    return rec_x, mu, logvar


# -----------------------------------------------------------------------------
# Pure-JAX reference (unfused, eval-mode semantics) for validation
# -----------------------------------------------------------------------------
def reference_forward(x, p):
    h = (x - p["bn1_m"]) * jax.lax.rsqrt(p["bn1_v"] + BN_EPS) * p["bn1_g"] + p["bn1_b"]
    h = _leaky(h @ p["w1"] + p["b1"])
    h = (h - p["bn2_m"]) * jax.lax.rsqrt(p["bn2_v"] + BN_EPS) * p["bn2_g"] + p["bn2_b"]
    h = _leaky(h @ p["w2"] + p["b2"])
    h = h @ p["w3"] + p["b3"]
    mu = h @ p["wmu"] + p["bmu"]
    logvar = h @ p["wlv"] + p["blv"]
    d = _leaky(mu @ p["wd1"] + p["bd1"])
    d = _leaky(d @ p["wd2"] + p["bd2"])
    rec = d @ p["wd3"] + p["bd3"]
    return rec, mu, logvar


if __name__ == "__main__":
    # Small, vreg-friendly sizes (hidden scaled down from 512 for the demo).
    BATCH = 8
    NUM_DOFS = 32
    LATENT_DIM = 32
    HIDDEN_DIM = 128

    key = jax.random.PRNGKey(0)
    kx, kp = jax.random.split(key)
    x = jax.random.normal(kx, (BATCH, NUM_DOFS), jnp.float32)
    params = init_params(kp, NUM_DOFS, LATENT_DIM, HIDDEN_DIM)
    ref_rec, ref_mu, ref_lv = reference_forward(x, params)

    # ---- f32 matmul path: strict-ish check against the reference ----
    kparams_f32 = prepare_kernel_params(params, matmul_dtype=jnp.float32)
    rec_x, mu, logvar = biomech_prior_vae_forward(x, kparams_f32)
    jax.block_until_ready((rec_x, mu, logvar))

    np.testing.assert_allclose(np.asarray(rec_x), np.asarray(ref_rec), rtol=1e-2, atol=1e-2)
    np.testing.assert_allclose(np.asarray(mu), np.asarray(ref_mu), rtol=1e-2, atol=1e-2)
    np.testing.assert_allclose(np.asarray(logvar), np.asarray(ref_lv), rtol=1e-2, atol=1e-2)
    assert rec_x.shape == (BATCH, NUM_DOFS)
    assert mu.shape == (BATCH, LATENT_DIM)
    assert logvar.shape == (BATCH, LATENT_DIM)

    # ---- ragged batch (exercise padding + slicing) ----
    x5 = x[:5]
    rec5, mu5, lv5 = biomech_prior_vae_forward(x5, kparams_f32)
    jax.block_until_ready((rec5, mu5, lv5))
    np.testing.assert_allclose(np.asarray(mu5), np.asarray(ref_mu[:5]), rtol=1e-2, atol=1e-2)

    # ---- multi-tile grid (grid_m >= 2, batch padding) ----
    x40 = jax.random.normal(jax.random.PRNGKey(1), (40, NUM_DOFS), jnp.float32)
    r40_rec, r40_mu, r40_lv = reference_forward(x40, params)
    rec40, mu40, lv40 = biomech_prior_vae_forward(x40, kparams_f32)
    jax.block_until_ready((rec40, mu40, lv40))
    np.testing.assert_allclose(np.asarray(rec40), np.asarray(r40_rec), rtol=1e-2, atol=1e-2)
    np.testing.assert_allclose(np.asarray(lv40), np.asarray(r40_lv), rtol=1e-2, atol=1e-2)

    # ---- bf16 matmul path (default; native MXU rate on v5e/v6e) ----
    # NOTE: activations are also bf16 between layers (not just weights), hence
    # the loose tolerance.
    kparams_bf16 = prepare_kernel_params(params)   # default matmul_dtype=bf16
    rec_b, mu_b, lv_b = biomech_prior_vae_forward(x, kparams_bf16)
    jax.block_until_ready((rec_b, mu_b, lv_b))
    np.testing.assert_allclose(np.asarray(mu_b), np.asarray(ref_mu), rtol=2e-1, atol=2e-1)
    np.testing.assert_allclose(np.asarray(rec_b), np.asarray(ref_rec), rtol=2e-1, atol=2e-1)

    print("KERNEL_OK")
</pallas_src>

<mosaic_0001>
module attributes {stable_mosaic.version = 11 : i64} {
  func.func @vae_fused_kernel(%arg0: i32, %arg1: memref<8x32xf32, #tpu.memory_space<vmem>>, %arg2: memref<32x128xf32, #tpu.memory_space<vmem>>, %arg3: memref<1x128xf32, #tpu.memory_space<vmem>>, %arg4: memref<128x128xf32, #tpu.memory_space<vmem>>, %arg5: memref<1x128xf32, #tpu.memory_space<vmem>>, %arg6: memref<128x64xf32, #tpu.memory_space<vmem>>, %arg7: memref<1x64xf32, #tpu.memory_space<vmem>>, %arg8: memref<32x128xf32, #tpu.memory_space<vmem>>, %arg9: memref<1x128xf32, #tpu.memory_space<vmem>>, %arg10: memref<128x128xf32, #tpu.memory_space<vmem>>, %arg11: memref<1x128xf32, #tpu.memory_space<vmem>>, %arg12: memref<128x32xf32, #tpu.memory_space<vmem>>, %arg13: memref<1x32xf32, #tpu.memory_space<vmem>>, %arg14: memref<8x128xf32, #tpu.memory_space<vmem>>) attributes {dimension_semantics = [#tpu.dimension_semantics<parallel>], iteration_bounds = array<i64: 1>, scalar_prefetch = 0 : i64, scratch_operands = 0 : i64, tpu.core_type = #tpu.core_type<tc>, window_params = [{transform_indices = @transform_0, window_bounds = array<i64: 8, 32>}, {pipeline_mode = #tpu.pipeline_mode<synchronous>, transform_indices = @transform_1, window_bounds = array<i64: 32, 128>}, {pipeline_mode = #tpu.pipeline_mode<synchronous>, transform_indices = @transform_2, window_bounds = array<i64: 1, 128>}, {pipeline_mode = #tpu.pipeline_mode<synchronous>, transform_indices = @transform_3, window_bounds = array<i64: 128, 128>}, {pipeline_mode = #tpu.pipeline_mode<synchronous>, transform_indices = @transform_4, window_bounds = array<i64: 1, 128>}, {pipeline_mode = #tpu.pipeline_mode<synchronous>, transform_indices = @transform_5, window_bounds = array<i64: 128, 64>}, {pipeline_mode = #tpu.pipeline_mode<synchronous>, transform_indices = @transform_6, window_bounds = array<i64: 1, 64>}, {pipeline_mode = #tpu.pipeline_mode<synchronous>, transform_indices = @transform_7, window_bounds = array<i64: 32, 128>}, {pipeline_mode = #tpu.pipeline_mode<synchronous>, transform_indices = @transform_8, window_bounds = array<i64: 1, 128>}, {pipeline_mode = #tpu.pipeline_mode<synchronous>, transform_indices = @transform_9, window_bounds = array<i64: 128, 128>}, {pipeline_mode = #tpu.pipeline_mode<synchronous>, transform_indices = @transform_10, window_bounds = array<i64: 1, 128>}, {pipeline_mode = #tpu.pipeline_mode<synchronous>, transform_indices = @transform_11, window_bounds = array<i64: 128, 32>}, {pipeline_mode = #tpu.pipeline_mode<synchronous>, transform_indices = @transform_12, window_bounds = array<i64: 1, 32>}, {transform_indices = @transform_13, window_bounds = array<i64: 8, 128>}]} {
    %c0 = arith.constant 0 : index
    %c0_0 = arith.constant 0 : index
    %0 = vector.load %arg1[%c0, %c0_0] : memref<8x32xf32, #tpu.memory_space<vmem>>, vector<8x32xf32>
    %c0_1 = arith.constant 0 : index
    %c0_2 = arith.constant 0 : index
    %1 = vector.load %arg2[%c0_1, %c0_2] : memref<32x128xf32, #tpu.memory_space<vmem>>, vector<32x128xf32>
    %cst = arith.constant dense<0.000000e+00> : vector<8x128xf32>
    %2 = tpu.matmul %0, %1, %cst {dimension_numbers = #tpu.dot_dimension_numbers<[1], [0], [0], [1], [0, 0, 1, 1], [], []>} : vector<8x32xf32>, vector<32x128xf32>, vector<8x128xf32> -> vector<8x128xf32>
    %c0_3 = arith.constant 0 : index
    %c0_4 = arith.constant 0 : index
    %3 = vector.load %arg3[%c0_3, %c0_4] : memref<1x128xf32, #tpu.memory_space<vmem>>, vector<1x128xf32>
    %4 = vector.broadcast %3 : vector<1x128xf32> to vector<8x128xf32>
    %5 = arith.addf %2, %4 : vector<8x128xf32>
    %cst_5 = arith.constant 0.000000e+00 : f32
    %6 = vector.broadcast %cst_5 : f32 to vector<8x128xf32>
    %7 = arith.cmpf ogt, %5, %6 : vector<8x128xf32>
    %cst_6 = arith.constant 0.00999999977 : f32
    %8 = vector.broadcast %cst_6 : f32 to vector<8x128xf32>
    %9 = arith.mulf %8, %5 : vector<8x128xf32>
    %10 = arith.select %7, %5, %9 : vector<8x128xi1>, vector<8x128xf32>
    %c0_7 = arith.constant 0 : index
    %c0_8 = arith.constant 0 : index
    %11 = vector.load %arg4[%c0_7, %c0_8] : memref<128x128xf32, #tpu.memory_space<vmem>>, vector<128x128xf32>
    %cst_9 = arith.constant dense<0.000000e+00> : vector<8x128xf32>
    %12 = tpu.matmul %10, %11, %cst_9 {dimension_numbers = #tpu.dot_dimension_numbers<[1], [0], [0], [1], [0, 0, 1, 1], [], []>} : vector<8x128xf32>, vector<128x128xf32>, vector<8x128xf32> -> vector<8x128xf32>
    %c0_10 = arith.constant 0 : index
    %c0_11 = arith.constant 0 : index
    %13 = vector.load %arg5[%c0_10, %c0_11] : memref<1x128xf32, #tpu.memory_space<vmem>>, vector<1x128xf32>
    %14 = vector.broadcast %13 : vector<1x128xf32> to vector<8x128xf32>
    %15 = arith.addf %12, %14 : vector<8x128xf32>
    %cst_12 = arith.constant 0.000000e+00 : f32
    %16 = vector.broadcast %cst_12 : f32 to vector<8x128xf32>
    %17 = arith.cmpf ogt, %15, %16 : vector<8x128xf32>
    %cst_13 = arith.constant 0.00999999977 : f32
    %18 = vector.broadcast %cst_13 : f32 to vector<8x128xf32>
    %19 = arith.mulf %18, %15 : vector<8x128xf32>
    %20 = arith.select %17, %15, %19 : vector<8x128xi1>, vector<8x128xf32>
    %c0_14 = arith.constant 0 : index
    %c0_15 = arith.constant 0 : index
    %21 = vector.load %arg6[%c0_14, %c0_15] : memref<128x64xf32, #tpu.memory_space<vmem>>, vector<128x64xf32>
    %cst_16 = arith.constant dense<0.000000e+00> : vector<8x64xf32>
    %22 = tpu.matmul %20, %21, %cst_16 {dimension_numbers = #tpu.dot_dimension_numbers<[1], [0], [0], [1], [0, 0, 1, 1], [], []>} : vector<8x128xf32>, vector<128x64xf32>, vector<8x64xf32> -> vector<8x64xf32>
    %c0_17 = arith.constant 0 : index
    %c0_18 = arith.constant 0 : index
    %23 = vector.load %arg7[%c0_17, %c0_18] : memref<1x64xf32, #tpu.memory_space<vmem>>, vector<1x64xf32>
    %24 = vector.broadcast %23 : vector<1x64xf32> to vector<8x64xf32>
    %25 = arith.addf %22, %24 : vector<8x64xf32>
    %26 = vector.extract_strided_slice %25 {offsets = [0, 0], sizes = [8, 32], strides = [1, 1]} : vector<8x64xf32> to vector<8x32xf32>
    %c0_19 = arith.constant 0 : index
    %c0_20 = arith.constant 0 : index
    %27 = vector.load %arg8[%c0_19, %c0_20] : memref<32x128xf32, #tpu.memory_space<vmem>>, vector<32x128xf32>
    %cst_21 = arith.constant dense<0.000000e+00> : vector<8x128xf32>
    %28 = tpu.matmul %26, %27, %cst_21 {dimension_numbers = #tpu.dot_dimension_numbers<[1], [0], [0], [1], [0, 0, 1, 1], [], []>} : vector<8x32xf32>, vector<32x128xf32>, vector<8x128xf32> -> vector<8x128xf32>
    %c0_22 = arith.constant 0 : index
    %c0_23 = arith.constant 0 : index
    %29 = vector.load %arg9[%c0_22, %c0_23] : memref<1x128xf32, #tpu.memory_space<vmem>>, vector<1x128xf32>
    %30 = vector.broadcast %29 : vector<1x128xf32> to vector<8x128xf32>
    %31 = arith.addf %28, %30 : vector<8x128xf32>
    %cst_24 = arith.constant 0.000000e+00 : f32
    %32 = vector.broadcast %cst_24 : f32 to vector<8x128xf32>
    %33 = arith.cmpf ogt, %31, %32 : vector<8x128xf32>
    %cst_25 = arith.constant 0.00999999977 : f32
    %34 = vector.broadcast %cst_25 : f32 to vector<8x128xf32>
    %35 = arith.mulf %34, %31 : vector<8x128xf32>
    %36 = arith.select %33, %31, %35 : vector<8x128xi1>, vector<8x128xf32>
    %c0_26 = arith.constant 0 : index
    %c0_27 = arith.constant 0 : index
    %37 = vector.load %arg10[%c0_26, %c0_27] : memref<128x128xf32, #tpu.memory_space<vmem>>, vector<128x128xf32>
    %cst_28 = arith.constant dense<0.000000e+00> : vector<8x128xf32>
    %38 = tpu.matmul %36, %37, %cst_28 {dimension_numbers = #tpu.dot_dimension_numbers<[1], [0], [0], [1], [0, 0, 1, 1], [], []>} : vector<8x128xf32>, vector<128x128xf32>, vector<8x128xf32> -> vector<8x128xf32>
    %c0_29 = arith.constant 0 : index
    %c0_30 = arith.constant 0 : index
    %39 = vector.load %arg11[%c0_29, %c0_30] : memref<1x128xf32, #tpu.memory_space<vmem>>, vector<1x128xf32>
    %40 = vector.broadcast %39 : vector<1x128xf32> to vector<8x128xf32>
    %41 = arith.addf %38, %40 : vector<8x128xf32>
    %cst_31 = arith.constant 0.000000e+00 : f32
    %42 = vector.broadcast %cst_31 : f32 to vector<8x128xf32>
    %43 = arith.cmpf ogt, %41, %42 : vector<8x128xf32>
    %cst_32 = arith.constant 0.00999999977 : f32
    %44 = vector.broadcast %cst_32 : f32 to vector<8x128xf32>
    %45 = arith.mulf %44, %41 : vector<8x128xf32>
    %46 = arith.select %43, %41, %45 : vector<8x128xi1>, vector<8x128xf32>
    %c0_33 = arith.constant 0 : index
    %c0_34 = arith.constant 0 : index
    %47 = vector.load %arg12[%c0_33, %c0_34] : memref<128x32xf32, #tpu.memory_space<vmem>>, vector<128x32xf32>
    %cst_35 = arith.constant dense<0.000000e+00> : vector<8x32xf32>
    %48 = tpu.matmul %46, %47, %cst_35 {dimension_numbers = #tpu.dot_dimension_numbers<[1], [0], [0], [1], [0, 0, 1, 1], [], []>} : vector<8x128xf32>, vector<128x32xf32>, vector<8x32xf32> -> vector<8x32xf32>
    %c0_36 = arith.constant 0 : index
    %c0_37 = arith.constant 0 : index
    %49 = vector.load %arg13[%c0_36, %c0_37] : memref<1x32xf32, #tpu.memory_space<vmem>>, vector<1x32xf32>
    %50 = vector.broadcast %49 : vector<1x32xf32> to vector<8x32xf32>
    %51 = arith.addf %48, %50 : vector<8x32xf32>
    %c0_38 = arith.constant 0 : index
    %c0_39 = arith.constant 0 : index
    %52 = vector.load %arg14[%c0_38, %c0_39] : memref<8x128xf32, #tpu.memory_space<vmem>>, vector<8x32xf32>
    tpu.vector_store %arg14[%c0_38, %c0_39], %51 {strides = array<i32>} : memref<8x128xf32, #tpu.memory_space<vmem>>, vector<8x32xf32>,
    %c0_40 = arith.constant 0 : index
    %c32 = arith.constant 32 : index
    %53 = vector.load %arg14[%c0_40, %c32] : memref<8x128xf32, #tpu.memory_space<vmem>>, vector<8x64xf32>
    tpu.vector_store %arg14[%c0_40, %c32], %25 {strides = array<i32>} : memref<8x128xf32, #tpu.memory_space<vmem>>, vector<8x64xf32>,
    %cst_41 = arith.constant 0.000000e+00 : f32
    %54 = vector.broadcast %cst_41 : f32 to vector<8x32xf32>
    %c0_42 = arith.constant 0 : index
    %c96 = arith.constant 96 : index
    %55 = vector.load %arg14[%c0_42, %c96] : memref<8x128xf32, #tpu.memory_space<vmem>>, vector<8x32xf32>
    tpu.vector_store %arg14[%c0_42, %c96], %54 {strides = array<i32>} : memref<8x128xf32, #tpu.memory_space<vmem>>, vector<8x32xf32>,
    return
  }
  func.func @transform_0(%arg0: i32) -> (i32, i32) {
    %c0_i32 = arith.constant 0 : i32
    %c0_i32_0 = arith.constant 0 : i32
    return %arg0, %c0_i32 : i32, i32
  }
  func.func @transform_1(%arg0: i32) -> (i32, i32) {
    %c0_i32 = arith.constant 0 : i32
    %c0_i32_0 = arith.constant 0 : i32
    %c0_i32_1 = arith.constant 0 : i32
    return %c0_i32, %c0_i32_0 : i32, i32
  }
  func.func @transform_2(%arg0: i32) -> (i32, i32) {
    %c0_i32 = arith.constant 0 : i32
    %c0_i32_0 = arith.constant 0 : i32
    %c0_i32_1 = arith.constant 0 : i32
    return %c0_i32, %c0_i32_0 : i32, i32
  }
  func.func @transform_3(%arg0: i32) -> (i32, i32) {
    %c0_i32 = arith.constant 0 : i32
    %c0_i32_0 = arith.constant 0 : i32
    %c0_i32_1 = arith.constant 0 : i32
    return %c0_i32, %c0_i32_0 : i32, i32
  }
  func.func @transform_4(%arg0: i32) -> (i32, i32) {
    %c0_i32 = arith.constant 0 : i32
    %c0_i32_0 = arith.constant 0 : i32
    %c0_i32_1 = arith.constant 0 : i32
    return %c0_i32, %c0_i32_0 : i32, i32
  }
  func.func @transform_5(%arg0: i32) -> (i32, i32) {
    %c0_i32 = arith.constant 0 : i32
    %c0_i32_0 = arith.constant 0 : i32
    %c0_i32_1 = arith.constant 0 : i32
    return %c0_i32, %c0_i32_0 : i32, i32
  }
  func.func @transform_6(%arg0: i32) -> (i32, i32) {
    %c0_i32 = arith.constant 0 : i32
    %c0_i32_0 = arith.constant 0 : i32
    %c0_i32_1 = arith.constant 0 : i32
    return %c0_i32, %c0_i32_0 : i32, i32
  }
  func.func @transform_7(%arg0: i32) -> (i32, i32) {
    %c0_i32 = arith.constant 0 : i32
    %c0_i32_0 = arith.constant 0 : i32
    %c0_i32_1 = arith.constant 0 : i32
    return %c0_i32, %c0_i32_0 : i32, i32
  }
  func.func @transform_8(%arg0: i32) -> (i32, i32) {
    %c0_i32 = arith.constant 0 : i32
    %c0_i32_0 = arith.constant 0 : i32
    %c0_i32_1 = arith.constant 0 : i32
    return %c0_i32, %c0_i32_0 : i32, i32
  }
  func.func @transform_9(%arg0: i32) -> (i32, i32) {
    %c0_i32 = arith.constant 0 : i32
    %c0_i32_0 = arith.constant 0 : i32
    %c0_i32_1 = arith.constant 0 : i32
    return %c0_i32, %c0_i32_0 : i32, i32
  }
  func.func @transform_10(%arg0: i32) -> (i32, i32) {
    %c0_i32 = arith.constant 0 : i32
    %c0_i32_0 = arith.constant 0 : i32
    %c0_i32_1 = arith.constant 0 : i32
    return %c0_i32, %c0_i32_0 : i32, i32
  }
  func.func @transform_11(%arg0: i32) -> (i32, i32) {
    %c0_i32 = arith.constant 0 : i32
    %c0_i32_0 = arith.constant 0 : i32
    %c0_i32_1 = arith.constant 0 : i32
    return %c0_i32, %c0_i32_0 : i32, i32
  }
  func.func @transform_12(%arg0: i32) -> (i32, i32) {
    %c0_i32 = arith.constant 0 : i32
    %c0_i32_0 = arith.constant 0 : i32
    %c0_i32_1 = arith.constant 0 : i32
    return %c0_i32, %c0_i32_0 : i32, i32
  }
  func.func @transform_13(%arg0: i32) -> (i32, i32) {
    %c0_i32 = arith.constant 0 : i32
    %c0_i32_0 = arith.constant 0 : i32
    return %arg0, %c0_i32 : i32, i32
  }
}

</mosaic_0001>

<llo_original>
// kernel: biomech_prior_vae_forward.1
$region0: #{biomech_prior_vae_forward.1}
  #allocation0 [shape = 'u32[]', space=smem, size = 0x4, offset = 0x4, fixed_abs, tag = 'smem constant byte address 0x4 - core index']
  #allocation1 [shape = 'u32[72,128]{1,0:T(1,128)}', space=vmem, size = 0x9000, scoped, tag = 'internal scratch']
  %s0 = inlined_call_operand.hbm [shape: f32[8,32], index: 0, kind: input, shape index: {}]
  %s1 = inlined_call_operand.vmem [shape: f32[32,128], index: 1, kind: input, shape index: {}]
  %s2 = inlined_call_operand.vmem [shape: f32[1,128], index: 2, kind: input, shape index: {}]
  %s3 = inlined_call_operand.vmem [shape: f32[128,128], index: 3, kind: input, shape index: {}]
  %s4 = inlined_call_operand.hbm [shape: f32[1,128], index: 4, kind: input, shape index: {}]
  %s5 = inlined_call_operand.vmem [shape: f32[128,64], index: 5, kind: input, shape index: {}]
  %s6 = inlined_call_operand.vmem [shape: f32[1,64], index: 6, kind: input, shape index: {}]
  %s7 = inlined_call_operand.hbm [shape: f32[32,128], index: 7, kind: input, shape index: {}]
  %s8 = inlined_call_operand.hbm [shape: f32[1,128], index: 8, kind: input, shape index: {}]
  %s9 = inlined_call_operand.vmem [shape: f32[128,128], index: 9, kind: input, shape index: {}]
  %s10 = inlined_call_operand.vmem [shape: f32[1,128], index: 10, kind: input, shape index: {}]
  %s11 = inlined_call_operand.vmem [shape: f32[128,32], index: 11, kind: input, shape index: {}]
  %s12 = inlined_call_operand.hbm [shape: f32[1,32], index: 12, kind: input, shape index: {}]
  %s13 = inlined_call_operand.vmem [shape: f32[8,128], index: 13, kind: output, shape index: {}]
  %s14 = sld [smem:[#allocation0]]
  $region82: #{biomech_prior_vae_forward.1} parent=0
    _
  %s16 = ssub.s32 1, %s14
  %s17 = scalar_select 0, %s16, %s14
  $region1: #{biomech_prior_vae_forward.1} parent=0
    #allocation2 [shape = 'u8[4096]{0}', space=vmem, size = 0x1000, scoped, tag = 'input window, operand 0, single buffered']
    #allocation3 [shape = 's32[1]{0}', space=sflag, size = 0x4, scoped, tag = 'scoped memory for biomech_prior_vae_forward.1']
    #allocation4 [shape = 'u8[512]{0}', space=vmem, size = 0x400, scoped, tag = 'input window, operand 4, single buffered']
    #allocation5 [shape = 's32[1]{0}', space=sflag, size = 0x4, scoped, tag = 'scoped memory for biomech_prior_vae_forward.1']
    #allocation6 [shape = 'u8[16384]{0}', space=vmem, size = 0x4000, scoped, tag = 'input window, operand 7, single buffered']
    #allocation7 [shape = 'u8[512]{0}', space=vmem, size = 0x400, scoped, tag = 'input window, operand 8, single buffered']
    #allocation8 [shape = 's32[1]{0}', space=sflag, size = 0x4, scoped, tag = 'scoped memory for biomech_prior_vae_forward.1']
    #allocation9 [shape = 'u8[512]{0}', space=vmem, size = 0x400, scoped, tag = 'input window, operand 12, single buffered']
    %18 = vsyncpa [#allocation3], 0
    %19 = vsyncpa [#allocation5], 0
    %20 = vsyncpa [#allocation8], 0
    // Predicated region
    $region2: #{biomech_prior_vae_forward.1} parent=1 // pred_check
      _
    $region3: #{biomech_prior_vae_forward.1} parent=1 // pred_check_branch
      %22 = sbr.rel (0) target = $region5
    $region4: #{biomech_prior_vae_forward.1} parent=1 // pred_region
      %24 = vsyncadd [#allocation3], 0
      %s26 = sshll.u32 %s0, 4
      %s27 = int_to_ptr.hbm [resolvable:$true] %s26
      %s28 = sshll.u32 [#allocation2], 4
      %s29 = int_to_ptr.vmem [resolvable:$true] %s28
      %31 = dma.hbm_to_vmem [thread:$0]  %s27, 128, %s29, [#allocation3]
    $region5: #{biomech_prior_vae_forward.1} parent=1 // pred_fallthru
      _
    // Predicated region
    $region6: #{biomech_prior_vae_forward.1} parent=1 // pred_check
      _
    $region7: #{biomech_prior_vae_forward.1} parent=1 // pred_check_branch
      %33 = sbr.rel (0) target = $region9
    $region8: #{biomech_prior_vae_forward.1} parent=1 // pred_region
      _
    $region9: #{biomech_prior_vae_forward.1} parent=1 // pred_fallthru
      _
    // Predicated region
    $region10: #{biomech_prior_vae_forward.1} parent=1 // pred_check
      _
    $region11: #{biomech_prior_vae_forward.1} parent=1 // pred_check_branch
      %35 = sbr.rel (0) target = $region13
    $region12: #{biomech_prior_vae_forward.1} parent=1 // pred_region
      _
    $region13: #{biomech_prior_vae_forward.1} parent=1 // pred_fallthru
      _
    // Predicated region
    $region14: #{biomech_prior_vae_forward.1} parent=1 // pred_check
      _
    $region15: #{biomech_prior_vae_forward.1} parent=1 // pred_check_branch
      %37 = sbr.rel (0) target = $region17
    $region16: #{biomech_prior_vae_forward.1} parent=1 // pred_region
      _
    $region17: #{biomech_prior_vae_forward.1} parent=1 // pred_fallthru
      _
    // Predicated region
    $region18: #{biomech_prior_vae_forward.1} parent=1 // pred_check
      _
    $region19: #{biomech_prior_vae_forward.1} parent=1 // pred_check_branch
      %39 = sbr.rel (0) target = $region21
    $region20: #{biomech_prior_vae_forward.1} parent=1 // pred_region
      %41 = vsyncadd [#allocation5], 0
      %s43 = sshll.u32 %s4, 4
      %s44 = int_to_ptr.hbm [resolvable:$true] %s43
      %s45 = sshll.u32 [#allocation4], 4
      %s46 = int_to_ptr.vmem [resolvable:$true] %s45
      %48 = dma.hbm_to_vmem [thread:$0]  %s44, 16, %s46, [#allocation5]
    $region21: #{biomech_prior_vae_forward.1} parent=1 // pred_fallthru
      _
    // Predicated region
    $region22: #{biomech_prior_vae_forward.1} parent=1 // pred_check
      _
    $region23: #{biomech_prior_vae_forward.1} parent=1 // pred_check_branch
      %50 = sbr.rel (0) target = $region25
    $region24: #{biomech_prior_vae_forward.1} parent=1 // pred_region
      _
    $region25: #{biomech_prior_vae_forward.1} parent=1 // pred_fallthru
      _
    // Predicated region
    $region26: #{biomech_prior_vae_forward.1} parent=1 // pred_check
      _
    $region27: #{biomech_prior_vae_forward.1} parent=1 // pred_check_branch
      %52 = sbr.rel (0) target = $region29
    $region28: #{biomech_prior_vae_forward.1} parent=1 // pred_region
      _
    $region29: #{biomech_prior_vae_forward.1} parent=1 // pred_fallthru
      _
    // Predicated region
    $region30: #{biomech_prior_vae_forward.1} parent=1 // pred_check
      _
    $region31: #{biomech_prior_vae_forward.1} parent=1 // pred_check_branch
      %54 = sbr.rel (0) target = $region33
    $region32: #{biomech_prior_vae_forward.1} parent=1 // pred_region
      %56 = vsyncadd [#allocation5], 0
      %s57 = sshll.u32 %s7, 4
      %s58 = int_to_ptr.hbm [resolvable:$true] %s57
      %s59 = sshll.u32 [#allocation6], 4
      %s60 = int_to_ptr.vmem [resolvable:$true] %s59
      %65 = dma.hbm_to_vmem [thread:$0]  %s58, 512, %s60, [#allocation5], 128, 128, 8
    $region33: #{biomech_prior_vae_forward.1} parent=1 // pred_fallthru
      _
    // Predicated region
    $region34: #{biomech_prior_vae_forward.1} parent=1 // pred_check
      _
    $region35: #{biomech_prior_vae_forward.1} parent=1 // pred_check_branch
      %67 = sbr.rel (0) target = $region37
    $region36: #{biomech_prior_vae_forward.1} parent=1 // pred_region
      %69 = vsyncadd [#allocation8], 0
      %s71 = sshll.u32 %s8, 4
      %s72 = int_to_ptr.hbm [resolvable:$true] %s71
      %s73 = sshll.u32 [#allocation7], 4
      %s74 = int_to_ptr.vmem [resolvable:$true] %s73
      %76 = dma.hbm_to_vmem [thread:$0]  %s72, 16, %s74, [#allocation8]
    $region37: #{biomech_prior_vae_forward.1} parent=1 // pred_fallthru
      _
    // Predicated region
    $region38: #{biomech_prior_vae_forward.1} parent=1 // pred_check
      _
    $region39: #{biomech_prior_vae_forward.1} parent=1 // pred_check_branch
      %78 = sbr.rel (0) target = $region41
    $region40: #{biomech_prior_vae_forward.1} parent=1 // pred_region
      _
    $region41: #{biomech_prior_vae_forward.1} parent=1 // pred_fallthru
      _
    // Predicated region
    $region42: #{biomech_prior_vae_forward.1} parent=1 // pred_check
      _
    $region43: #{biomech_prior_vae_forward.1} parent=1 // pred_check_branch
      %80 = sbr.rel (0) target = $region45
    $region44: #{biomech_prior_vae_forward.1} parent=1 // pred_region
      _
    $region45: #{biomech_prior_vae_forward.1} parent=1 // pred_fallthru
      _
    // Predicated region
    $region46: #{biomech_prior_vae_forward.1} parent=1 // pred_check
      _
    $region47: #{biomech_prior_vae_forward.1} parent=1 // pred_check_branch
      %82 = sbr.rel (0) target = $region49
    $region48: #{biomech_prior_vae_forward.1} parent=1 // pred_region
      _
    $region49: #{biomech_prior_vae_forward.1} parent=1 // pred_fallthru
      _
    // Predicated region
    $region50: #{biomech_prior_vae_forward.1} parent=1 // pred_check
      _
    $region51: #{biomech_prior_vae_forward.1} parent=1 // pred_check_branch
      %84 = sbr.rel (0) target = $region53
    $region52: #{biomech_prior_vae_forward.1} parent=1 // pred_region
      %86 = vsyncadd [#allocation8], 0
      %s88 = sshll.u32 %s12, 4
      %s89 = int_to_ptr.hbm [resolvable:$true] %s88
      %s90 = sshll.u32 [#allocation9], 4
      %s91 = int_to_ptr.vmem [resolvable:$true] %s90
      %93 = dma.hbm_to_vmem [thread:$0]  %s89, 16, %s91, [#allocation8]
    $region53: #{biomech_prior_vae_forward.1} parent=1 // pred_fallthru
      _
    // Predicated region
    $region54: #{biomech_prior_vae_forward.1} parent=1 // pred_check
      _
    $region55: #{biomech_prior_vae_forward.1} parent=1 // pred_check_branch
      %95 = sbr.rel (0) target = $region57
    $region56: #{biomech_prior_vae_forward.1} parent=1 // pred_region
      %97 = dma.done [#allocation3], 128
    $region57: #{biomech_prior_vae_forward.1} parent=1 // pred_fallthru
      _
    // Predicated region
    $region58: #{biomech_prior_vae_forward.1} parent=1 // pred_check
      _
    $region59: #{biomech_prior_vae_forward.1} parent=1 // pred_check_branch
      %99 = sbr.rel (0) target = $region61
    $region60: #{biomech_prior_vae_forward.1} parent=1 // pred_region
      %101 = dma.done [#allocation5], 16
    $region61: #{biomech_prior_vae_forward.1} parent=1 // pred_fallthru
      _
    // Predicated region
    $region62: #{biomech_prior_vae_forward.1} parent=1 // pred_check
      _
    $region63: #{biomech_prior_vae_forward.1} parent=1 // pred_check_branch
      %103 = sbr.rel (0) target = $region65
    $region64: #{biomech_prior_vae_forward.1} parent=1 // pred_region
      %105 = dma.done [#allocation5], 512
    $region65: #{biomech_prior_vae_forward.1} parent=1 // pred_fallthru
      _
    // Predicated region
    $region66: #{biomech_prior_vae_forward.1} parent=1 // pred_check
      _
    $region67: #{biomech_prior_vae_forward.1} parent=1 // pred_check_branch
      %107 = sbr.rel (0) target = $region69
    $region68: #{biomech_prior_vae_forward.1} parent=1 // pred_region
      %109 = dma.done [#allocation8], 16
    $region69: #{biomech_prior_vae_forward.1} parent=1 // pred_fallthru
      _
    // Predicated region
    $region70: #{biomech_prior_vae_forward.1} parent=1 // pred_check
      _
    $region71: #{biomech_prior_vae_forward.1} parent=1 // pred_check_branch
      %111 = sbr.rel (0) target = $region73
    $region72: #{biomech_prior_vae_forward.1} parent=1 // pred_region
      %113 = dma.done [#allocation8], 16
    $region73: #{biomech_prior_vae_forward.1} parent=1 // pred_fallthru
      _
    %v114 = vld [vmem:[#allocation2] sm:$0xff]
    %v115 = vld [vmem:[%s1] sm:$0xff]
    %v116 = vld [vmem:[%s1 + $0x8] sm:$0xff]
    %v117 = vld [vmem:[%s1 + $0x10] sm:$0xff]
    %v118 = vld [vmem:[%s1 + $0x18] sm:$0xff]
    %v119 = vld [vmem:[%s2] sm:$0x1]
    %v121 = vperm.slane %v119, 0
    %vm123 = vcmask 261120
    %v125 = vsel %vm123, %v114, 0
    %127 = vmatpush.msra.mxu0 0.0
    %128 = vmatpush.msra.mxu0 0.0
    %129 = vmatpush.msra.mxu0 0.0
    %130 = vmatpush.msra.mxu0 0.0
    %131 = vmatpush.msra.mxu0 0.0
    %132 = vmatpush.msra.mxu0 0.0
    %133 = vmatpush.msra.mxu0 0.0
    %134 = vmatpush.msra.mxu0 0.0
    %135 = vmatpush.msra.mxu0 0.0
    %136 = vmatpush.msra.mxu0 0.0
    %137 = vmatpush.msra.mxu0 0.0
    %138 = vmatpush.msra.mxu0 0.0
    %139 = vmatpush.msra.mxu0 %v118
    %140 = vmatpush.msra.mxu0 %v117
    %141 = vmatpush.msra.mxu0 %v116
    %142 = vmatpush.msra.mxu0 %v115
    %143 = vmatmul.f32.gmra.mxu0 %v125
    %v144 = vpop.f32.mrf.mxu0
    %v145 = vadd.f32 %v121, %v144
    %146 = vdwg.mxu0
    %vm147 = vcmp.gt.f32.partialorder %v145, 0.0
    %v148 = vmul.f32 %v145, 0.01
    %v149 = vsel %vm147, %v145, %v148
    %v150 = vld [vmem:[%s3] sm:$0xff]
    %v151 = vld [vmem:[%s3 + $0x8] sm:$0xff]
    %v152 = vld [vmem:[%s3 + $0x10] sm:$0xff]
    %v153 = vld [vmem:[%s3 + $0x18] sm:$0xff]
    %v154 = vld [vmem:[%s3 + $0x20] sm:$0xff]
    %v155 = vld [vmem:[%s3 + $0x28] sm:$0xff]
    %v156 = vld [vmem:[%s3 + $0x30] sm:$0xff]
    %v157 = vld [vmem:[%s3 + $0x38] sm:$0xff]
    %v158 = vld [vmem:[%s3 + $0x40] sm:$0xff]
    %v159 = vld [vmem:[%s3 + $0x48] sm:$0xff]
    %v160 = vld [vmem:[%s3 + $0x50] sm:$0xff]
    %v161 = vld [vmem:[%s3 + $0x58] sm:$0xff]
    %v162 = vld [vmem:[%s3 + $0x60] sm:$0xff]
    %v163 = vld [vmem:[%s3 + $0x68] sm:$0xff]
    %v164 = vld [vmem:[%s3 + $0x70] sm:$0xff]
    %v165 = vld [vmem:[%s3 + $0x78] sm:$0xff]
    %v166 = vld [vmem:[#allocation4] sm:$0x1]
    %v168 = vperm.slane %v166, 0
    %170 = vmatpush.msra.mxu0 %v165
    %171 = vmatpush.msra.mxu0 %v164
    %172 = vmatpush.msra.mxu0 %v163
    %173 = vmatpush.msra.mxu0 %v162
    %174 = vmatpush.msra.mxu0 %v161
    %175 = vmatpush.msra.mxu0 %v160
    %176 = vmatpush.msra.mxu0 %v159
    %177 = vmatpush.msra.mxu0 %v158
    %178 = vmatpush.msra.mxu0 %v157
    %179 = vmatpush.msra.mxu0 %v156
    %180 = vmatpush.msra.mxu0 %v155
    %181 = vmatpush.msra.mxu0 %v154
    %182 = vmatpush.msra.mxu0 %v153
    %183 = vmatpush.msra.mxu0 %v152
    %184 = vmatpush.msra.mxu0 %v151
    %185 = vmatpush.msra.mxu0 %v150
    %186 = vmatmul.f32.gmra.mxu0 %v149
    %v187 = vpop.f32.mrf.mxu0
    %v188 = vadd.f32 %v168, %v187
    %189 = vdwg.mxu0
    %vm190 = vcmp.gt.f32.partialorder %v188, 0.0
    %v191 = vmul.f32 %v188, 0.01
    %v192 = vsel %vm190, %v188, %v191
    %v193 = vld [vmem:[%s5] sm:$0xff]
    %v194 = vld [vmem:[%s5 + $0x8] sm:$0xff]
    %v195 = vld [vmem:[%s5 + $0x10] sm:$0xff]
    %v196 = vld [vmem:[%s5 + $0x18] sm:$0xff]
    %v197 = vld [vmem:[%s5 + $0x20] sm:$0xff]
    %v198 = vld [vmem:[%s5 + $0x28] sm:$0xff]
    %v199 = vld [vmem:[%s5 + $0x30] sm:$0xff]
    %v200 = vld [vmem:[%s5 + $0x38] sm:$0xff]
    %v201 = vld [vmem:[%s5 + $0x40] sm:$0xff]
    %v202 = vld [vmem:[%s5 + $0x48] sm:$0xff]
    %v203 = vld [vmem:[%s5 + $0x50] sm:$0xff]
    %v204 = vld [vmem:[%s5 + $0x58] sm:$0xff]
    %v205 = vld [vmem:[%s5 + $0x60] sm:$0xff]
    %v206 = vld [vmem:[%s5 + $0x68] sm:$0xff]
    %v207 = vld [vmem:[%s5 + $0x70] sm:$0xff]
    %v208 = vld [vmem:[%s5 + $0x78] sm:$0xff]
    %v209 = vld [vmem:[%s6] sm:$0x1]
    %v211 = vperm.slane %v209, 0
    %213 = vmatpush.msra.mxu0 %v208
    %214 = vmatpush.msra.mxu0 %v207
    %215 = vmatpush.msra.mxu0 %v206
    %216 = vmatpush.msra.mxu0 %v205
    %217 = vmatpush.msra.mxu0 %v204
    %218 = vmatpush.msra.mxu0 %v203
    %219 = vmatpush.msra.mxu0 %v202
    %220 = vmatpush.msra.mxu0 %v201
    %221 = vmatpush.msra.mxu0 %v200
    %222 = vmatpush.msra.mxu0 %v199
    %223 = vmatpush.msra.mxu0 %v198
    %224 = vmatpush.msra.mxu0 %v197
    %225 = vmatpush.msra.mxu0 %v196
    %226 = vmatpush.msra.mxu0 %v195
    %227 = vmatpush.msra.mxu0 %v194
    %228 = vmatpush.msra.mxu0 %v193
    %229 = vmatmul.f32.gmra.mxu0 %v192
    %v230 = vpop.f32.mrf.mxu0
    %v231 = vadd.f32 %v211, %v230
    %232 = vdwg.mxu0
    %v233 = vld [vmem:[#allocation6] sm:$0xff]
    %v234 = vld [vmem:[#allocation6 + $0x8] sm:$0xff]
    %v235 = vld [vmem:[#allocation6 + $0x10] sm:$0xff]
    %v236 = vld [vmem:[#allocation6 + $0x18] sm:$0xff]
    %v237 = vld [vmem:[#allocation7] sm:$0x1]
    %v239 = vperm.slane %v237, 0
    %v242 = vsel %vm123, %v231, 0
    %244 = vmatpush.msra.mxu0 0.0
    %245 = vmatpush.msra.mxu0 0.0
    %246 = vmatpush.msra.mxu0 0.0
    %247 = vmatpush.msra.mxu0 0.0
    %248 = vmatpush.msra.mxu0 0.0
    %249 = vmatpush.msra.mxu0 0.0
    %250 = vmatpush.msra.mxu0 0.0
    %251 = vmatpush.msra.mxu0 0.0
    %252 = vmatpush.msra.mxu0 0.0
    %253 = vmatpush.msra.mxu0 0.0
    %254 = vmatpush.msra.mxu0 0.0
    %255 = vmatpush.msra.mxu0 0.0
    %256 = vmatpush.msra.mxu0 %v236
    %257 = vmatpush.msra.mxu0 %v235
    %258 = vmatpush.msra.mxu0 %v234
    %259 = vmatpush.msra.mxu0 %v233
    %260 = vmatmul.f32.gmra.mxu0 %v242
    %v261 = vpop.f32.mrf.mxu0
    %v262 = vadd.f32 %v239, %v261
    %263 = vdwg.mxu0
    %vm264 = vcmp.gt.f32.partialorder %v262, 0.0
    %v265 = vmul.f32 %v262, 0.01
    %v266 = vsel %vm264, %v262, %v265
    %v267 = vld [vmem:[%s9] sm:$0xff]
    %v268 = vld [vmem:[%s9 + $0x8] sm:$0xff]
    %v269 = vld [vmem:[%s9 + $0x10] sm:$0xff]
    %v270 = vld [vmem:[%s9 + $0x18] sm:$0xff]
    %v271 = vld [vmem:[%s9 + $0x20] sm:$0xff]
    %v272 = vld [vmem:[%s9 + $0x28] sm:$0xff]
    %v273 = vld [vmem:[%s9 + $0x30] sm:$0xff]
    %v274 = vld [vmem:[%s9 + $0x38] sm:$0xff]
    %v275 = vld [vmem:[%s9 + $0x40] sm:$0xff]
    %v276 = vld [vmem:[%s9 + $0x48] sm:$0xff]
    %v277 = vld [vmem:[%s9 + $0x50] sm:$0xff]
    %v278 = vld [vmem:[%s9 + $0x58] sm:$0xff]
    %v279 = vld [vmem:[%s9 + $0x60] sm:$0xff]
    %v280 = vld [vmem:[%s9 + $0x68] sm:$0xff]
    %v281 = vld [vmem:[%s9 + $0x70] sm:$0xff]
    %v282 = vld [vmem:[%s9 + $0x78] sm:$0xff]
    %v283 = vld [vmem:[%s10] sm:$0x1]
    %v285 = vperm.slane %v283, 0
    %287 = vmatpush.msra.mxu0 %v282
    %288 = vmatpush.msra.mxu0 %v281
    %289 = vmatpush.msra.mxu0 %v280
    %290 = vmatpush.msra.mxu0 %v279
    %291 = vmatpush.msra.mxu0 %v278
    %292 = vmatpush.msra.mxu0 %v277
    %293 = vmatpush.msra.mxu0 %v276
    %294 = vmatpush.msra.mxu0 %v275
    %295 = vmatpush.msra.mxu0 %v274
    %296 = vmatpush.msra.mxu0 %v273
    %297 = vmatpush.msra.mxu0 %v272
    %298 = vmatpush.msra.mxu0 %v271
    %299 = vmatpush.msra.mxu0 %v270
    %300 = vmatpush.msra.mxu0 %v269
    %301 = vmatpush.msra.mxu0 %v268
    %302 = vmatpush.msra.mxu0 %v267
    %303 = vmatmul.f32.gmra.mxu0 %v266
    %v304 = vpop.f32.mrf.mxu0
    %v305 = vadd.f32 %v285, %v304
    %306 = vdwg.mxu0
    %vm307 = vcmp.gt.f32.partialorder %v305, 0.0
    %v308 = vmul.f32 %v305, 0.01
    %v309 = vsel %vm307, %v305, %v308
    %v310 = vld [vmem:[%s11] sm:$0xff]
    %v311 = vld [vmem:[%s11 + $0x8] sm:$0xff]
    %v312 = vld [vmem:[%s11 + $0x10] sm:$0xff]
    %v313 = vld [vmem:[%s11 + $0x18] sm:$0xff]
    %v314 = vld [vmem:[%s11 + $0x20] sm:$0xff]
    %v315 = vld [vmem:[%s11 + $0x28] sm:$0xff]
    %v316 = vld [vmem:[%s11 + $0x30] sm:$0xff]
    %v317 = vld [vmem:[%s11 + $0x38] sm:$0xff]
    %v318 = vld [vmem:[%s11 + $0x40] sm:$0xff]
    %v319 = vld [vmem:[%s11 + $0x48] sm:$0xff]
    %v320 = vld [vmem:[%s11 + $0x50] sm:$0xff]
    %v321 = vld [vmem:[%s11 + $0x58] sm:$0xff]
    %v322 = vld [vmem:[%s11 + $0x60] sm:$0xff]
    %v323 = vld [vmem:[%s11 + $0x68] sm:$0xff]
    %v324 = vld [vmem:[%s11 + $0x70] sm:$0xff]
    %v325 = vld [vmem:[%s11 + $0x78] sm:$0xff]
    %v326 = vld [vmem:[#allocation9] sm:$0x1]
    %v328 = vperm.slane %v326, 0
    %330 = vmatpush.msra.mxu0 %v325
    %331 = vmatpush.msra.mxu0 %v324
    %332 = vmatpush.msra.mxu0 %v323
    %333 = vmatpush.msra.mxu0 %v322
    %334 = vmatpush.msra.mxu0 %v321
    %335 = vmatpush.msra.mxu0 %v320
    %336 = vmatpush.msra.mxu0 %v319
    %337 = vmatpush.msra.mxu0 %v318
    %338 = vmatpush.msra.mxu0 %v317
    %339 = vmatpush.msra.mxu0 %v316
    %340 = vmatpush.msra.mxu0 %v315
    %341 = vmatpush.msra.mxu0 %v314
    %342 = vmatpush.msra.mxu0 %v313
    %343 = vmatpush.msra.mxu0 %v312
    %344 = vmatpush.msra.mxu0 %v311
    %345 = vmatpush.msra.mxu0 %v310
    %346 = vmatmul.f32.gmra.mxu0 %v309
    %v347 = vpop.f32.mrf.mxu0
    %v348 = vadd.f32 %v328, %v347
    %349 = vdwg.mxu0
    %350 = vst.msk [vmem:[%s13] sm:$0xff] %vm123, %v348
    %351 = vrot.lane.b32.xlu0 %v231, 32
    %v352 = vpop.permute.xlu0 %351
    %vm354 = vcmask 785664
    %355 = vst.msk [vmem:[%s13] sm:$0xff] %vm354, %v352
    %vm356 = vcmask 1048320
    %357 = vst.msk [vmem:[%s13] sm:$0xff] %vm356, 0.0
    // Predicated region
    $region74: #{biomech_prior_vae_forward.1} parent=1 // pred_check
      _
    $region75: #{biomech_prior_vae_forward.1} parent=1 // pred_check_branch
      %359 = sbr.rel (0) target = $region77
    $region76: #{biomech_prior_vae_forward.1} parent=1 // pred_region
      _
    $region77: #{biomech_prior_vae_forward.1} parent=1 // pred_fallthru
      _
    // Predicated region
    $region78: #{biomech_prior_vae_forward.1} parent=1 // pred_check
      _
    $region79: #{biomech_prior_vae_forward.1} parent=1 // pred_check_branch
      %361 = sbr.rel (0) target = $region81
    $region80: #{biomech_prior_vae_forward.1} parent=1 // pred_region
      _
    $region81: #{biomech_prior_vae_forward.1} parent=1 // pred_fallthru
      _
    %362 = vsyncpa [#allocation3], 1
    %363 = vsyncpa [#allocation5], 1
    %364 = vsyncpa [#allocation8], 1

</llo_original>
